<compile_context>
chip_gen: v7x
topology: tpu7x:2x2x1
jax: 0.10.0
libtpu: 0.0.40
codegen_flags: <defaults>
</compile_context>

<pallas_src>
import functools

import jax
import jax.numpy as jnp
from jax.experimental import pallas as pl
from jax.experimental.pallas import tpu as pltpu


_LANE = 128
_BN_EPS = 1e-5
_NEG_SLOPE = 0.01                      # nn.LeakyReLU default


def _round_up(n, m):
    return ((n + m - 1) // m) * m


def _pad_dim(d):
    """Pad a feature dim to a lane-dense size whose divisors include MXU-sized tiles."""
    d_p = _round_up(d, _LANE)
    if d_p > 512 and d_p % 256:
        d_p = _round_up(d_p, 256)      # guarantees 256-wide tiles divide
    return d_p


# ---------------------------------------------------------------------------
# Chip-derived VMEM budgets (per review: do not hard-code 40/48 MiB).
# ---------------------------------------------------------------------------
def _vmem_capacity_bytes():
    try:
        return int(pltpu.get_tpu_info().vmem_capacity_bytes)
    except Exception:
        return 64 * 1024 * 1024        # conservative (v7x-sized) default

_VMEM_CAP = _vmem_capacity_bytes()
_VMEM_LIMIT = int(_VMEM_CAP * 0.75)    # vmem_limit_bytes passed to the compiler
_FUSED_BUDGET = int(_VMEM_CAP * 0.65)  # footprint budget for fused paths
_TILED_BUDGET = int(_VMEM_CAP * 0.55)  # footprint budget per tiled layer


# ---------------------------------------------------------------------------
# Feature-detect pipeline_mode=pl.Buffered(1) (single-buffer constant-index
# operands). Falls back to default double buffering if unsupported.
# ---------------------------------------------------------------------------
_BUFFERED1 = None


def _probe_buffered1():
    def _k(x_ref, o_ref):
        o_ref[...] = x_ref[...] + 1.0

    try:
        spec = pl.BlockSpec((8, _LANE), lambda i: (0, 0), pipeline_mode=pl.Buffered(1))
        fn = pl.pallas_call(
            _k,
            out_shape=jax.ShapeDtypeStruct((8, _LANE), jnp.float32),
            grid=(1,),
            in_specs=[spec],
            out_specs=pl.BlockSpec((8, _LANE), lambda i: (0, 0)),
        )
        jax.block_until_ready(fn(jnp.zeros((8, _LANE), jnp.float32)))
        return True
    except Exception:
        return False


def _buffered1_supported():
    global _BUFFERED1
    if _BUFFERED1 is None:
        _BUFFERED1 = _probe_buffered1()
    return _BUFFERED1


def _spec(shape, index_map, single_buffer=False):
    if single_buffer and _buffered1_supported():
        return pl.BlockSpec(shape, index_map, pipeline_mode=pl.Buffered(1))
    return pl.BlockSpec(shape, index_map)


# ---------------------------------------------------------------------------
# BatchNorm (training-mode batch stats) + LeakyReLU on a full-batch tile.
# ---------------------------------------------------------------------------
def _bn_act(y, p, use_bn, use_act):
    """y: (B, tile) f32 pre-activation (Linear bias NOT added when use_bn).
    p: (8, tile) f32; rows = [bias, gamma, beta, 0, ...]."""
    if use_bn:
        # Linear bias is cancelled exactly by the mean subtraction -> never added.
        mean = jnp.mean(y, axis=0, keepdims=True)
        yc = y - mean                                       # centered variance
        var = jnp.mean(yc * yc, axis=0, keepdims=True)
        y = yc * (p[1:2, :] * jax.lax.rsqrt(var + _BN_EPS)) + p[2:3, :]
    else:
        y = y + p[0:1, :]
    if use_act:
        y = jnp.maximum(y, _NEG_SLOPE * y)                  # LeakyReLU(0.01)
    return y


# ---------------------------------------------------------------------------
# Fused path A: weights resident in VMEM (single pallas_call). When no layer
# uses BatchNorm the grid tiles the batch ("parallel") to use both v7x cores.
# ---------------------------------------------------------------------------
def _fused_resident_kernel(x_ref, *refs, flags):
    out_ref = refs[-1]
    h = x_ref[...]                                          # (bt, Din0_p) bf16
    for li, (use_bn, use_act) in enumerate(flags):          # static unroll
        w = refs[2 * li][...]                               # (Din_p, Dout_p) bf16
        p = refs[2 * li + 1][...]                           # (8, Dout_p) f32
        y = jnp.dot(h.astype(w.dtype), w, preferred_element_type=jnp.float32)
        h = _bn_act(y, p, use_bn, use_act)
    out_ref[...] = h.astype(out_ref.dtype)


def _fused_resident(x_pad, layers, nbt):
    b, d_in0_p = x_pad.shape
    bt = b // nbt
    d_out_p = layers[-1]["d_out_p"]
    flags = tuple((l["use_bn"], l["use_act"]) for l in layers)
    args = [x_pad]
    in_specs = [_spec((bt, d_in0_p), lambda i: (i, 0), single_buffer=(nbt == 1))]
    for l in layers:
        args += [l["w"], l["p"]]
        in_specs += [_spec(l["w"].shape, lambda i: (0, 0), single_buffer=True),
                     _spec(l["p"].shape, lambda i: (0, 0), single_buffer=True)]
    return pl.pallas_call(
        functools.partial(_fused_resident_kernel, flags=flags),
        out_shape=jax.ShapeDtypeStruct((b, d_out_p), jnp.float32),
        grid=(nbt,),
        in_specs=in_specs,
        out_specs=pl.BlockSpec((bt, d_out_p), lambda i: (i, 0)),
        compiler_params=pltpu.CompilerParams(
            dimension_semantics=("parallel" if nbt > 1 else "arbitrary",),
            vmem_limit_bytes=_VMEM_LIMIT),
    )(*args)


# ---------------------------------------------------------------------------
# Fused path B: activations resident in VMEM, weights streamed from HBM with
# a 2-slot manual double buffer so next-layer DMA overlaps current compute.
# ---------------------------------------------------------------------------
def _fused_streaming_kernel(x_ref, *refs, flags, dims):
    n = len(flags)
    w_hbm = refs[0:2 * n:2]
    p_hbm = refs[1:2 * n:2]
    out_ref = refs[2 * n]
    wbuf, pbuf, sem = refs[2 * n + 1], refs[2 * n + 2], refs[2 * n + 3]

    def w_cp(i, slot):
        din, dout = dims[i]
        return pltpu.make_async_copy(w_hbm[i], wbuf.at[slot, :din, :dout],
                                     sem.at[slot, 0])

    def p_cp(i, slot):
        dout = dims[i][1]
        return pltpu.make_async_copy(p_hbm[i], pbuf.at[slot, :, :dout],
                                     sem.at[slot, 1])

    w_cp(0, 0).start()
    p_cp(0, 0).start()
    h = x_ref[...]
    for li, (use_bn, use_act) in enumerate(flags):          # static unroll
        slot = li & 1
        din, dout = dims[li]
        w_cp(li, slot).wait()
        p_cp(li, slot).wait()
        if li + 1 < n:                                      # prefetch next layer
            w_cp(li + 1, 1 - slot).start()
            p_cp(li + 1, 1 - slot).start()
        w = wbuf[slot, :din, :dout]
        p = pbuf[slot, :, :dout]
        y = jnp.dot(h.astype(w.dtype), w, preferred_element_type=jnp.float32)
        h = _bn_act(y, p, use_bn, use_act)
    out_ref[...] = h.astype(out_ref.dtype)


def _fused_streaming(x_pad, layers):
    b, d_in0_p = x_pad.shape
    d_out_p = layers[-1]["d_out_p"]
    flags = tuple((l["use_bn"], l["use_act"]) for l in layers)
    dims = tuple((l["d_in_p"], l["d_out_p"]) for l in layers)
    max_din = max(d for d, _ in dims)
    max_dout = max(d for _, d in dims)
    mxu_dtype = layers[0]["w"].dtype
    args = [x_pad]
    in_specs = [_spec((b, d_in0_p), lambda i: (0, 0), single_buffer=True)]
    for l in layers:
        args += [l["w"], l["p"]]
        in_specs += [pl.BlockSpec(memory_space=pl.ANY),
                     pl.BlockSpec(memory_space=pl.ANY)]
    return pl.pallas_call(
        functools.partial(_fused_streaming_kernel, flags=flags, dims=dims),
        out_shape=jax.ShapeDtypeStruct((b, d_out_p), jnp.float32),
        grid=(1,),
        in_specs=in_specs,
        out_specs=pl.BlockSpec((b, d_out_p), lambda i: (0, 0)),
        scratch_shapes=[
            pltpu.VMEM((2, max_din, max_dout), mxu_dtype),
            pltpu.VMEM((2, 8, max_dout), jnp.float32),
            pltpu.SemaphoreType.DMA((2, 2)),
        ],
        compiler_params=pltpu.CompilerParams(
            dimension_semantics=("arbitrary",),
            vmem_limit_bytes=_VMEM_LIMIT),
    )(*args)


# ---------------------------------------------------------------------------
# Per-layer tiled fallback (full batch per block: BN needs the whole batch).
# ---------------------------------------------------------------------------
def _tile_candidates(d):
    return [d] + [t for t in (512, 256, 128) if t < d and d % t == 0]


def _plan_tiles(b, d_in_p, d_out_p, in_elt, out_elt, budget):
    def footprint(tk, tn):
        nk = d_in_p // tk
        x_b = (1 if nk == 1 else 2) * b * tk * in_elt       # x (1 buf when K-resident)
        w_b = 2 * tk * tn * 2                               # bf16 weights, double-buffered
        p_b = 2 * 8 * tn * 4
        o_b = 2 * b * tn * out_elt
        acc = b * tn * 4 if nk > 1 else 0
        return x_b + w_b + p_b + o_b + acc

    for tk in _tile_candidates(d_in_p):       # prefer tk = d_in_p: x DMA'd once
        for tn in _tile_candidates(d_out_p):  # shrink tn first
            if footprint(tk, tn) <= budget:
                return tk, tn
    return _tile_candidates(d_in_p)[-1], _tile_candidates(d_out_p)[-1]


def _tiled_layer_kernel_single(x_ref, w_ref, p_ref, o_ref, *, use_bn, use_act):
    y = jnp.dot(x_ref[...], w_ref[...], preferred_element_type=jnp.float32)
    o_ref[...] = _bn_act(y, p_ref[...], use_bn, use_act).astype(o_ref.dtype)


def _tiled_layer_kernel_multi(x_ref, w_ref, p_ref, o_ref, acc_ref, *, use_bn, use_act):
    k = pl.program_id(1)

    @pl.when(k == 0)
    def _():
        acc_ref[...] = jnp.zeros_like(acc_ref)

    acc_ref[...] += jnp.dot(x_ref[...], w_ref[...], preferred_element_type=jnp.float32)

    @pl.when(k == pl.num_programs(1) - 1)
    def _():
        o_ref[...] = _bn_act(acc_ref[...], p_ref[...], use_bn, use_act
                             ).astype(o_ref.dtype)


def _tiled_layer(x_pad, layer, *, out_dtype, budget):
    b, d_in_p = x_pad.shape
    d_out_p = layer["d_out_p"]
    tk, tn = _plan_tiles(b, d_in_p, d_out_p,
                         x_pad.dtype.itemsize, jnp.dtype(out_dtype).itemsize, budget)
    nk, nn = d_in_p // tk, d_out_p // tn
    if nk == 1:
        kernel = functools.partial(_tiled_layer_kernel_single,
                                   use_bn=layer["use_bn"], use_act=layer["use_act"])
        return pl.pallas_call(
            kernel,
            out_shape=jax.ShapeDtypeStruct((b, d_out_p), out_dtype),
            grid=(nn,),
            in_specs=[
                _spec((b, tk), lambda n: (0, 0), single_buffer=True),   # x resident
                pl.BlockSpec((tk, tn), lambda n: (0, n)),
                pl.BlockSpec((8, tn), lambda n: (0, n)),
            ],
            out_specs=pl.BlockSpec((b, tn), lambda n: (0, n)),
            compiler_params=pltpu.CompilerParams(
                dimension_semantics=("parallel",),
                vmem_limit_bytes=_VMEM_LIMIT),
        )(x_pad, layer["w"], layer["p"])

    kernel = functools.partial(_tiled_layer_kernel_multi,
                               use_bn=layer["use_bn"], use_act=layer["use_act"])
    return pl.pallas_call(
        kernel,
        out_shape=jax.ShapeDtypeStruct((b, d_out_p), out_dtype),
        grid=(nn, nk),
        in_specs=[
            pl.BlockSpec((b, tk), lambda n, k: (0, k)),
            pl.BlockSpec((tk, tn), lambda n, k: (k, n)),
            pl.BlockSpec((8, tn), lambda n, k: (0, n)),
        ],
        out_specs=pl.BlockSpec((b, tn), lambda n, k: (0, n)),
        scratch_shapes=[pltpu.VMEM((b, tn), jnp.float32)],
        compiler_params=pltpu.CompilerParams(
            dimension_semantics=("parallel", "arbitrary"),
            vmem_limit_bytes=_VMEM_LIMIT),
    )(x_pad, layer["w"], layer["p"])


# ---------------------------------------------------------------------------
# Module wrapper
# ---------------------------------------------------------------------------
class MLP:
    """JAX/Pallas port of the PyTorch MLP (constant hidden dim)."""

    def __init__(self, n_input, n_output, n_layers, n_hidden, use_batch_norm,
                 use_activation=True, last_layer_activation=True, *,
                 key, mxu_dtype=jnp.bfloat16):
        # TODO(synk): eval-mode BatchNorm (running_mean/var) is not implemented;
        # this matches PyTorch training-mode batch statistics (dropping the Linear
        # bias under BN is only exact in that mode).
        # TODO(synk): optional fp8 weight quantization for v7x (per-column scale
        # folded into gamma/bias) would halve weight traffic again.
        self.n_output = n_output
        self.resident_budget_bytes = _FUSED_BUDGET
        self.streaming_budget_bytes = _FUSED_BUDGET
        self.tiled_budget_bytes = _TILED_BUDGET
        layer_dims = [n_input] + n_layers * [n_hidden] + [n_output]
        self.layers = []
        for i in range(1, len(layer_dims)):
            skip_act = (not last_layer_activation) and i == len(layer_dims) - 1
            d_in, d_out = layer_dims[i - 1], layer_dims[i]
            d_in_p, d_out_p = _pad_dim(d_in), _pad_dim(d_out)
            key, kw, kb = jax.random.split(key, 3)
            bound = d_in ** -0.5
            w = jax.random.uniform(kw, (d_out, d_in), jnp.float32, -bound, bound)
            b = jax.random.uniform(kb, (d_out,), jnp.float32, -bound, bound)
            # Pre-transposed (Din, Dout), zero-padded lane-dense, cast once for MXU.
            w_t = jnp.zeros((d_in_p, d_out_p), jnp.float32)
            w_t = w_t.at[:d_in, :d_out].set(w.T).astype(mxu_dtype)
            p = jnp.zeros((8, d_out_p), jnp.float32)        # rows: bias, gamma, beta, 0...
            p = p.at[0, :d_out].set(b)
            p = p.at[1, :d_out].set(1.0)
            self.layers.append(dict(
                w=w_t, p=p,
                use_bn=bool(use_batch_norm and not skip_act),
                use_act=bool(use_activation and not skip_act),
                d_in=d_in, d_out=d_out, d_in_p=d_in_p, d_out_p=d_out_p))
        self._any_bn = any(l["use_bn"] for l in self.layers)
        self._max_din = max(l["d_in_p"] for l in self.layers)
        self._max_dout = max(l["d_out_p"] for l in self.layers)
        self._max_d = max(self._max_din, self._max_dout)

    # ---- footprint models --------------------------------------------------
    def _pick_nbt(self, b):
        # Batch tiling (dual-core on v7x) only when BN is absent (BN needs full batch).
        if self._any_bn or b < 16:
            return 1
        for nbt in (2, 4, 8):
            if b % nbt == 0 and (b // nbt) % 8 == 0:
                return nbt
        return 1

    def _resident_bytes(self, bt):
        wbufs = 1 if _buffered1_supported() else 2
        total = 2 * bt * self.layers[0]["d_in_p"] * 2              # x (bf16)
        total += 2 * bt * self.layers[-1]["d_out_p"] * 4           # out (f32)
        for l in self.layers:
            total += wbufs * (l["w"].size * l["w"].dtype.itemsize + l["p"].size * 4)
        total += 3 * bt * self._max_d * 4                          # live activations
        return total

    def _streaming_bytes(self, b):
        total = 2 * b * self.layers[0]["d_in_p"] * 2
        total += 2 * b * self.layers[-1]["d_out_p"] * 4
        total += 2 * self._max_din * self._max_dout * self.layers[0]["w"].dtype.itemsize
        total += 2 * 8 * self._max_dout * 4
        total += 3 * b * self._max_d * 4
        return total

    def __call__(self, x):
        b = x.shape[0]
        d_in_p = self.layers[0]["d_in_p"]
        x = x.astype(jnp.bfloat16)                 # halve input/activation HBM traffic
        if x.shape[1] != d_in_p:
            x = jnp.pad(x, ((0, 0), (0, d_in_p - x.shape[1])))
        nbt = self._pick_nbt(b)
        if self._resident_bytes(b // nbt) <= self.resident_budget_bytes:
            out = _fused_resident(x, self.layers, nbt)
        elif self._streaming_bytes(b) <= self.streaming_budget_bytes:
            out = _fused_streaming(x, self.layers)
        else:
            h = x
            for i, layer in enumerate(self.layers):
                last = i == len(self.layers) - 1
                h = _tiled_layer(h, layer,
                                 out_dtype=jnp.float32 if last else jnp.bfloat16,
                                 budget=self.tiled_budget_bytes)
            out = h
        return out[:, :self.n_output].astype(jnp.float32)


# Pure-JAX reference mirroring the kernels' precision choices (for checking).
def _reference_forward(x, mlp):
    d_in_p = mlp.layers[0]["d_in_p"]
    h = x.astype(jnp.bfloat16)
    if h.shape[1] != d_in_p:
        h = jnp.pad(h, ((0, 0), (0, d_in_p - h.shape[1])))
    h = h.astype(jnp.float32)
    for l in mlp.layers:
        w = l["w"].astype(jnp.float32)
        y = jnp.dot(h.astype(l["w"].dtype).astype(jnp.float32), w)
        h = _bn_act(y, l["p"], l["use_bn"], l["use_act"])
    return h[:, :mlp.n_output]


if __name__ == "__main__":
    key = jax.random.PRNGKey(0)
    key, k_x, k_p1, k_x2, k_p2, k_x3, k_p3 = jax.random.split(key, 7)

    # --- Small MLP with BatchNorm: resident-fused, streaming-fused, tiled ---
    batch, n_input, n_hidden, n_output, n_layers = 8, 16, 32, 8, 2
    x = jax.random.normal(k_x, (batch, n_input), jnp.float32)
    mlp = MLP(n_input=n_input, n_output=n_output, n_layers=n_layers,
              n_hidden=n_hidden, use_batch_norm=True, key=k_p1)
    ref = _reference_forward(x, mlp)

    out_resident = jax.block_until_ready(mlp(x))          # resident fused path
    assert out_resident.shape == (batch, n_output)
    assert jnp.allclose(out_resident, ref, atol=1e-2, rtol=1e-2)

    mlp.resident_budget_bytes = 0                         # force streaming fused path
    out_stream = jax.block_until_ready(mlp(x))
    assert jnp.allclose(out_stream, ref, atol=1e-2, rtol=1e-2)

    mlp.streaming_budget_bytes = 0                        # force per-layer tiled path
    out_tiled = jax.block_until_ready(mlp(x))
    assert jnp.allclose(out_tiled, ref, atol=1e-2, rtol=1e-2)

    # --- No-BN MLP with batch 16: batch-tiled ("parallel") fused grid ---
    x2 = jax.random.normal(k_x2, (16, n_input), jnp.float32)
    mlp2 = MLP(n_input=n_input, n_output=n_output, n_layers=n_layers,
               n_hidden=n_hidden, use_batch_norm=False,
               last_layer_activation=False, key=k_p2)
    out2 = jax.block_until_ready(mlp2(x2))
    assert out2.shape == (16, n_output)
    assert jnp.allclose(out2, _reference_forward(x2, mlp2), atol=1e-2, rtol=1e-2)

    # --- Wider MLP forced onto the tiled path with a tight budget: exercises
    #     the K-tiled accumulator kernel. ---
    mlp3 = MLP(n_input=700, n_output=200, n_layers=1, n_hidden=600,
               use_batch_norm=True, key=k_p3)
    mlp3.resident_budget_bytes = 0
    mlp3.streaming_budget_bytes = 0
    mlp3.tiled_budget_bytes = 400_000
    x3 = jax.random.normal(k_x3, (8, 700), jnp.float32)
    out3 = jax.block_until_ready(mlp3(x3))
    assert out3.shape == (8, 200)
    assert jnp.allclose(out3, _reference_forward(x3, mlp3), atol=1e-2, rtol=1e-2)

    print("KERNEL_OK")
</pallas_src>

<mosaic_0001>
module attributes {stable_mosaic.version = 11 : i64} {
  func.func @_k(%arg0: i32, %arg1: memref<8x128xf32, #tpu.memory_space<vmem>>, %arg2: memref<8x128xf32, #tpu.memory_space<vmem>>) attributes {dimension_semantics = [#tpu.dimension_semantics<arbitrary>], iteration_bounds = array<i64: 1>, scalar_prefetch = 0 : i64, scratch_operands = 0 : i64, tpu.core_type = #tpu.core_type<tc>, window_params = [{pipeline_mode = #tpu.pipeline_mode<synchronous>, transform_indices = @transform_0, window_bounds = array<i64: 8, 128>}, {pipeline_mode = #tpu.pipeline_mode<synchronous>, transform_indices = @transform_1, window_bounds = array<i64: 8, 128>}]} {
    %c0 = arith.constant 0 : index
    %c0_0 = arith.constant 0 : index
    %0 = vector.load %arg1[%c0, %c0_0] : memref<8x128xf32, #tpu.memory_space<vmem>>, vector<8x128xf32>
    %cst = arith.constant 1.000000e+00 : f32
    %1 = vector.broadcast %cst : f32 to vector<8x128xf32>
    %2 = arith.addf %0, %1 : vector<8x128xf32>
    %c0_1 = arith.constant 0 : index
    %c0_2 = arith.constant 0 : index
    %3 = vector.load %arg2[%c0_1, %c0_2] : memref<8x128xf32, #tpu.memory_space<vmem>>, vector<8x128xf32>
    tpu.vector_store %arg2[%c0_1, %c0_2], %2 {strides = array<i32>} : memref<8x128xf32, #tpu.memory_space<vmem>>, vector<8x128xf32>,
    return
  }
  func.func @transform_0(%arg0: i32) -> (i32, i32) {
    %c0_i32 = arith.constant 0 : i32
    %c0_i32_0 = arith.constant 0 : i32
    %c0_i32_1 = arith.constant 0 : i32
    return %c0_i32, %c0_i32_0 : i32, i32
  }
  func.func @transform_1(%arg0: i32) -> (i32, i32) {
    %c0_i32 = arith.constant 0 : i32
    %c0_i32_0 = arith.constant 0 : i32
    %c0_i32_1 = arith.constant 0 : i32
    return %c0_i32, %c0_i32_0 : i32, i32
  }
}

module attributes {stable_mosaic.version = 11 : i64} {
  func.func @_fused_resident_kernel(%arg0: i32, %arg1: memref<8x128xbf16, #tpu.memory_space<vmem>>, %arg2: memref<128x128xbf16, #tpu.memory_space<vmem>>, %arg3: memref<8x128xf32, #tpu.memory_space<vmem>>, %arg4: memref<128x128xbf16, #tpu.memory_space<vmem>>, %arg5: memref<8x128xf32, #tpu.memory_space<vmem>>, %arg6: memref<128x128xbf16, #tpu.memory_space<vmem>>, %arg7: memref<8x128xf32, #tpu.memory_space<vmem>>, %arg8: memref<8x128xf32, #tpu.memory_space<vmem>>) attributes {dimension_semantics = [#tpu.dimension_semantics<arbitrary>], iteration_bounds = array<i64: 1>, scalar_prefetch = 0 : i64, scratch_operands = 0 : i64, tpu.core_type = #tpu.core_type<tc>, window_params = [{transform_indices = @transform_0, window_bounds = array<i64: 8, 128>}, {pipeline_mode = #tpu.pipeline_mode<synchronous>, transform_indices = @transform_1, window_bounds = array<i64: 128, 128>}, {pipeline_mode = #tpu.pipeline_mode<synchronous>, transform_indices = @transform_2, window_bounds = array<i64: 8, 128>}, {pipeline_mode = #tpu.pipeline_mode<synchronous>, transform_indices = @transform_3, window_bounds = array<i64: 128, 128>}, {pipeline_mode = #tpu.pipeline_mode<synchronous>, transform_indices = @transform_4, window_bounds = array<i64: 8, 128>}, {pipeline_mode = #tpu.pipeline_mode<synchronous>, transform_indices = @transform_5, window_bounds = array<i64: 128, 128>}, {pipeline_mode = #tpu.pipeline_mode<synchronous>, transform_indices = @transform_6, window_bounds = array<i64: 8, 128>}, {transform_indices = @transform_7, window_bounds = array<i64: 8, 128>}]} {
    %c0 = arith.constant 0 : index
    %c0_0 = arith.constant 0 : index
    %0 = vector.load %arg1[%c0, %c0_0] : memref<8x128xbf16, #tpu.memory_space<vmem>>, vector<8x128xbf16>
    %c0_1 = arith.constant 0 : index
    %c0_2 = arith.constant 0 : index
    %1 = vector.load %arg2[%c0_1, %c0_2] : memref<128x128xbf16, #tpu.memory_space<vmem>>, vector<128x128xbf16>
    %c0_3 = arith.constant 0 : index
    %c0_4 = arith.constant 0 : index
    %2 = vector.load %arg3[%c0_3, %c0_4] : memref<8x128xf32, #tpu.memory_space<vmem>>, vector<8x128xf32>
    %cst = arith.constant dense<0.000000e+00> : vector<8x128xf32>
    %3 = tpu.matmul %0, %1, %cst {dimension_numbers = #tpu.dot_dimension_numbers<[1], [0], [0], [1], [0, 0, 1, 1], [], []>} : vector<8x128xbf16>, vector<128x128xbf16>, vector<8x128xf32> -> vector<8x128xf32>
    %cst_5 = arith.constant dense<0.000000e+00> : vector<128xf32>
    %4 = vector.multi_reduction <add>, %3, %cst_5 [0] : vector<8x128xf32> to vector<128xf32>
    %5 = vector.shape_cast %4 : vector<128xf32> to vector<1x128xf32>
    %cst_6 = arith.constant 8.000000e+00 : f32
    %6 = vector.broadcast %cst_6 : f32 to vector<1x128xf32>
    %7 = arith.divf %5, %6 : vector<1x128xf32>
    %8 = vector.broadcast %7 : vector<1x128xf32> to vector<8x128xf32>
    %9 = arith.subf %3, %8 : vector<8x128xf32>
    %10 = arith.mulf %9, %9 : vector<8x128xf32>
    %cst_7 = arith.constant dense<0.000000e+00> : vector<128xf32>
    %11 = vector.multi_reduction <add>, %10, %cst_7 [0] : vector<8x128xf32> to vector<128xf32>
    %12 = vector.shape_cast %11 : vector<128xf32> to vector<1x128xf32>
    %cst_8 = arith.constant 8.000000e+00 : f32
    %13 = vector.broadcast %cst_8 : f32 to vector<1x128xf32>
    %14 = arith.divf %12, %13 : vector<1x128xf32>
    %15 = vector.extract_strided_slice %2 {offsets = [1, 0], sizes = [1, 128], strides = [1, 1]} : vector<8x128xf32> to vector<1x128xf32>
    %cst_9 = arith.constant 9.99999974E-6 : f32
    %16 = vector.broadcast %cst_9 : f32 to vector<1x128xf32>
    %17 = arith.addf %14, %16 : vector<1x128xf32>
    %18 = math.rsqrt %17 : vector<1x128xf32>
    %19 = arith.mulf %15, %18 : vector<1x128xf32>
    %20 = vector.broadcast %19 : vector<1x128xf32> to vector<8x128xf32>
    %21 = arith.mulf %9, %20 : vector<8x128xf32>
    %22 = vector.extract_strided_slice %2 {offsets = [2, 0], sizes = [1, 128], strides = [1, 1]} : vector<8x128xf32> to vector<1x128xf32>
    %23 = vector.broadcast %22 : vector<1x128xf32> to vector<8x128xf32>
    %24 = arith.addf %21, %23 : vector<8x128xf32>
    %cst_10 = arith.constant 0.00999999977 : f32
    %25 = vector.broadcast %cst_10 : f32 to vector<8x128xf32>
    %26 = arith.mulf %25, %24 : vector<8x128xf32>
    %27 = arith.maximumf %24, %26 : vector<8x128xf32>
    %c0_11 = arith.constant 0 : index
    %c0_12 = arith.constant 0 : index
    %28 = vector.load %arg4[%c0_11, %c0_12] : memref<128x128xbf16, #tpu.memory_space<vmem>>, vector<128x128xbf16>
    %c0_13 = arith.constant 0 : index
    %c0_14 = arith.constant 0 : index
    %29 = vector.load %arg5[%c0_13, %c0_14] : memref<8x128xf32, #tpu.memory_space<vmem>>, vector<8x128xf32>
    %30 = arith.truncf %27 : vector<8x128xf32> to vector<8x128xbf16>
    %cst_15 = arith.constant dense<0.000000e+00> : vector<8x128xf32>
    %31 = tpu.matmul %30, %28, %cst_15 {dimension_numbers = #tpu.dot_dimension_numbers<[1], [0], [0], [1], [0, 0, 1, 1], [], []>} : vector<8x128xbf16>, vector<128x128xbf16>, vector<8x128xf32> -> vector<8x128xf32>
    %cst_16 = arith.constant dense<0.000000e+00> : vector<128xf32>
    %32 = vector.multi_reduction <add>, %31, %cst_16 [0] : vector<8x128xf32> to vector<128xf32>
    %33 = vector.shape_cast %32 : vector<128xf32> to vector<1x128xf32>
    %cst_17 = arith.constant 8.000000e+00 : f32
    %34 = vector.broadcast %cst_17 : f32 to vector<1x128xf32>
    %35 = arith.divf %33, %34 : vector<1x128xf32>
    %36 = vector.broadcast %35 : vector<1x128xf32> to vector<8x128xf32>
    %37 = arith.subf %31, %36 : vector<8x128xf32>
    %38 = arith.mulf %37, %37 : vector<8x128xf32>
    %cst_18 = arith.constant dense<0.000000e+00> : vector<128xf32>
    %39 = vector.multi_reduction <add>, %38, %cst_18 [0] : vector<8x128xf32> to vector<128xf32>
    %40 = vector.shape_cast %39 : vector<128xf32> to vector<1x128xf32>
    %cst_19 = arith.constant 8.000000e+00 : f32
    %41 = vector.broadcast %cst_19 : f32 to vector<1x128xf32>
    %42 = arith.divf %40, %41 : vector<1x128xf32>
    %43 = vector.extract_strided_slice %29 {offsets = [1, 0], sizes = [1, 128], strides = [1, 1]} : vector<8x128xf32> to vector<1x128xf32>
    %cst_20 = arith.constant 9.99999974E-6 : f32
    %44 = vector.broadcast %cst_20 : f32 to vector<1x128xf32>
    %45 = arith.addf %42, %44 : vector<1x128xf32>
    %46 = math.rsqrt %45 : vector<1x128xf32>
    %47 = arith.mulf %43, %46 : vector<1x128xf32>
    %48 = vector.broadcast %47 : vector<1x128xf32> to vector<8x128xf32>
    %49 = arith.mulf %37, %48 : vector<8x128xf32>
    %50 = vector.extract_strided_slice %29 {offsets = [2, 0], sizes = [1, 128], strides = [1, 1]} : vector<8x128xf32> to vector<1x128xf32>
    %51 = vector.broadcast %50 : vector<1x128xf32> to vector<8x128xf32>
    %52 = arith.addf %49, %51 : vector<8x128xf32>
    %cst_21 = arith.constant 0.00999999977 : f32
    %53 = vector.broadcast %cst_21 : f32 to vector<8x128xf32>
    %54 = arith.mulf %53, %52 : vector<8x128xf32>
    %55 = arith.maximumf %52, %54 : vector<8x128xf32>
    %c0_22 = arith.constant 0 : index
    %c0_23 = arith.constant 0 : index
    %56 = vector.load %arg6[%c0_22, %c0_23] : memref<128x128xbf16, #tpu.memory_space<vmem>>, vector<128x128xbf16>
    %c0_24 = arith.constant 0 : index
    %c0_25 = arith.constant 0 : index
    %57 = vector.load %arg7[%c0_24, %c0_25] : memref<8x128xf32, #tpu.memory_space<vmem>>, vector<8x128xf32>
    %58 = arith.truncf %55 : vector<8x128xf32> to vector<8x128xbf16>
    %cst_26 = arith.constant dense<0.000000e+00> : vector<8x128xf32>
    %59 = tpu.matmul %58, %56, %cst_26 {dimension_numbers = #tpu.dot_dimension_numbers<[1], [0], [0], [1], [0, 0, 1, 1], [], []>} : vector<8x128xbf16>, vector<128x128xbf16>, vector<8x128xf32> -> vector<8x128xf32>
    %cst_27 = arith.constant dense<0.000000e+00> : vector<128xf32>
    %60 = vector.multi_reduction <add>, %59, %cst_27 [0] : vector<8x128xf32> to vector<128xf32>
    %61 = vector.shape_cast %60 : vector<128xf32> to vector<1x128xf32>
    %cst_28 = arith.constant 8.000000e+00 : f32
    %62 = vector.broadcast %cst_28 : f32 to vector<1x128xf32>
    %63 = arith.divf %61, %62 : vector<1x128xf32>
    %64 = vector.broadcast %63 : vector<1x128xf32> to vector<8x128xf32>
    %65 = arith.subf %59, %64 : vector<8x128xf32>
    %66 = arith.mulf %65, %65 : vector<8x128xf32>
    %cst_29 = arith.constant dense<0.000000e+00> : vector<128xf32>
    %67 = vector.multi_reduction <add>, %66, %cst_29 [0] : vector<8x128xf32> to vector<128xf32>
    %68 = vector.shape_cast %67 : vector<128xf32> to vector<1x128xf32>
    %cst_30 = arith.constant 8.000000e+00 : f32
    %69 = vector.broadcast %cst_30 : f32 to vector<1x128xf32>
    %70 = arith.divf %68, %69 : vector<1x128xf32>
    %71 = vector.extract_strided_slice %57 {offsets = [1, 0], sizes = [1, 128], strides = [1, 1]} : vector<8x128xf32> to vector<1x128xf32>
    %cst_31 = arith.constant 9.99999974E-6 : f32
    %72 = vector.broadcast %cst_31 : f32 to vector<1x128xf32>
    %73 = arith.addf %70, %72 : vector<1x128xf32>
    %74 = math.rsqrt %73 : vector<1x128xf32>
    %75 = arith.mulf %71, %74 : vector<1x128xf32>
    %76 = vector.broadcast %75 : vector<1x128xf32> to vector<8x128xf32>
    %77 = arith.mulf %65, %76 : vector<8x128xf32>
    %78 = vector.extract_strided_slice %57 {offsets = [2, 0], sizes = [1, 128], strides = [1, 1]} : vector<8x128xf32> to vector<1x128xf32>
    %79 = vector.broadcast %78 : vector<1x128xf32> to vector<8x128xf32>
    %80 = arith.addf %77, %79 : vector<8x128xf32>
    %cst_32 = arith.constant 0.00999999977 : f32
    %81 = vector.broadcast %cst_32 : f32 to vector<8x128xf32>
    %82 = arith.mulf %81, %80 : vector<8x128xf32>
    %83 = arith.maximumf %80, %82 : vector<8x128xf32>
    %c0_33 = arith.constant 0 : index
    %c0_34 = arith.constant 0 : index
    %84 = vector.load %arg8[%c0_33, %c0_34] : memref<8x128xf32, #tpu.memory_space<vmem>>, vector<8x128xf32>
    tpu.vector_store %arg8[%c0_33, %c0_34], %83 {strides = array<i32>} : memref<8x128xf32, #tpu.memory_space<vmem>>, vector<8x128xf32>,
    return
  }
  func.func @transform_0(%arg0: i32) -> (i32, i32) {
    %c0_i32 = arith.constant 0 : i32
    %c0_i32_0 = arith.constant 0 : i32
    return %arg0, %c0_i32 : i32, i32
  }
  func.func @transform_1(%arg0: i32) -> (i32, i32) {
    %c0_i32 = arith.constant 0 : i32
    %c0_i32_0 = arith.constant 0 : i32
    %c0_i32_1 = arith.constant 0 : i32
    return %c0_i32, %c0_i32_0 : i32, i32
  }
  func.func @transform_2(%arg0: i32) -> (i32, i32) {
    %c0_i32 = arith.constant 0 : i32
    %c0_i32_0 = arith.constant 0 : i32
    %c0_i32_1 = arith.constant 0 : i32
    return %c0_i32, %c0_i32_0 : i32, i32
  }
  func.func @transform_3(%arg0: i32) -> (i32, i32) {
    %c0_i32 = arith.constant 0 : i32
    %c0_i32_0 = arith.constant 0 : i32
    %c0_i32_1 = arith.constant 0 : i32
    return %c0_i32, %c0_i32_0 : i32, i32
  }
  func.func @transform_4(%arg0: i32) -> (i32, i32) {
    %c0_i32 = arith.constant 0 : i32
    %c0_i32_0 = arith.constant 0 : i32
    %c0_i32_1 = arith.constant 0 : i32
    return %c0_i32, %c0_i32_0 : i32, i32
  }
  func.func @transform_5(%arg0: i32) -> (i32, i32) {
    %c0_i32 = arith.constant 0 : i32
    %c0_i32_0 = arith.constant 0 : i32
    %c0_i32_1 = arith.constant 0 : i32
    return %c0_i32, %c0_i32_0 : i32, i32
  }
  func.func @transform_6(%arg0: i32) -> (i32, i32) {
    %c0_i32 = arith.constant 0 : i32
    %c0_i32_0 = arith.constant 0 : i32
    %c0_i32_1 = arith.constant 0 : i32
    return %c0_i32, %c0_i32_0 : i32, i32
  }
  func.func @transform_7(%arg0: i32) -> (i32, i32) {
    %c0_i32 = arith.constant 0 : i32
    %c0_i32_0 = arith.constant 0 : i32
    return %arg0, %c0_i32 : i32, i32
  }
}

</mosaic_0001>

<llo_original>
// kernel: tpu_custom_call.1
$region0: #{tpu_custom_call.1}
  #allocation0 [shape = 'u32[]', space=smem, size = 0x4, offset = 0x4, fixed_abs, tag = 'smem constant byte address 0x4 - core index']
  #allocation1 [shape = 'u32[144,128]{1,0:T(1,128)}', space=vmem, size = 0x12000, scoped, tag = 'internal scratch']
  %s0 = inlined_call_operand.hbm [shape: f32[8,128], index: 0, kind: input, shape index: {}]
  %s1 = inlined_call_operand.hbm [shape: f32[8,128], index: 1, kind: output, shape index: {}]
  %s2 = sld [smem:[#allocation0]]
  $region18: #{tpu_custom_call.1} parent=0
    _
  %s4 = ssub.s32 1, %s2
  %s5 = scalar_select 0, %s4, %s2
  $region1: #{tpu_custom_call.1} parent=0
    #allocation2 [shape = 'u8[4096]{0}', space=vmem, size = 0x1000, scoped, tag = 'input window, operand 0, single buffered']
    #allocation3 [shape = 's32[1]{0}', space=sflag, size = 0x4, scoped, tag = 'scoped memory for tpu_custom_call.1']
    #allocation4 [shape = 's32[1]{0}', space=sflag, size = 0x4, scoped, tag = 'scoped memory for tpu_custom_call.1']
    #allocation5 [shape = 'u8[4096]{0}', space=vmem, size = 0x1000, scoped, tag = 'output window, operand 0, single buffered']
    %6 = vsyncpa [#allocation3], 0
    %7 = vsyncpa [#allocation4], 0
    // Predicated region
    $region2: #{tpu_custom_call.1} parent=1 // pred_check
      _
    $region3: #{tpu_custom_call.1} parent=1 // pred_check_branch
      %9 = sbr.rel (0) target = $region5
    $region4: #{tpu_custom_call.1} parent=1 // pred_region
      %s11 = ssub.s32 128, 128
      %12 = vsyncadd [#allocation3], %s11
      %s14 = sshll.u32 [#allocation2], 4
      %s15 = int_to_ptr.vmem [resolvable:$true] %s14
      %17 = dma.hbm_to_vmem [thread:$0]  %s0, 128, %s15, [#allocation3]
    $region5: #{tpu_custom_call.1} parent=1 // pred_fallthru
      _
    // Predicated region
    $region6: #{tpu_custom_call.1} parent=1 // pred_check
      _
    $region7: #{tpu_custom_call.1} parent=1 // pred_check_branch
      %19 = sbr.rel (0) target = $region9
    $region8: #{tpu_custom_call.1} parent=1 // pred_region
      %20 = dma.done [#allocation3], 128
    $region9: #{tpu_custom_call.1} parent=1 // pred_fallthru
      _
    %v21 = vld [vmem:[#allocation2] sm:$0xff]
    %v22 = vadd.f32 %v21, 1.0
    %23 = vst [vmem:[#allocation5] sm:$0xff] %v22
    // Predicated region
    $region10: #{tpu_custom_call.1} parent=1 // pred_check
      _
    $region11: #{tpu_custom_call.1} parent=1 // pred_check_branch
      %25 = sbr.rel (0) target = $region13
    $region12: #{tpu_custom_call.1} parent=1 // pred_region
      %s27 = ssub.s32 128, 128
      %28 = vsyncadd [#allocation4], %s27
      %s30 = sshll.u32 [#allocation5], 4
      %s31 = int_to_ptr.vmem [resolvable:$true] %s30
      %33 = dma.vmem_to_hbm [thread:$0]  %s31, 128, %s1, [#allocation4]
    $region13: #{tpu_custom_call.1} parent=1 // pred_fallthru
      _
    // Predicated region
    $region14: #{tpu_custom_call.1} parent=1 // pred_check
      _
    $region15: #{tpu_custom_call.1} parent=1 // pred_check_branch
      %35 = sbr.rel (0) target = $region17
    $region16: #{tpu_custom_call.1} parent=1 // pred_region
      %36 = dma.done [#allocation4], 128
    $region17: #{tpu_custom_call.1} parent=1 // pred_fallthru
      _
    %37 = vsyncpa [#allocation3], 1
    %38 = vsyncpa [#allocation4], 1

// kernel: tpu_custom_call.1
$region0: #{tpu_custom_call.1}
  #allocation0 [shape = 'u32[]', space=smem, size = 0x4, offset = 0x4, fixed_abs, tag = 'smem constant byte address 0x4 - core index']
  #allocation1 [shape = 'u32[144,128]{1,0:T(1,128)}', space=vmem, size = 0x12000, scoped, tag = 'internal scratch']
  %s0 = inlined_call_operand.hbm [shape: bf16[8,128], index: 0, kind: input, shape index: {}]
  %s1 = inlined_call_operand.hbm [shape: bf16[128,128], index: 1, kind: input, shape index: {}]
  %s2 = inlined_call_operand.hbm [shape: f32[8,128], index: 2, kind: input, shape index: {}]
  %s3 = inlined_call_operand.hbm [shape: bf16[128,128], index: 3, kind: input, shape index: {}]
  %s4 = inlined_call_operand.vmem [shape: f32[8,128], index: 4, kind: input, shape index: {}]
  %s5 = inlined_call_operand.hbm [shape: bf16[128,128], index: 5, kind: input, shape index: {}]
  %s6 = inlined_call_operand.vmem [shape: f32[8,128], index: 6, kind: input, shape index: {}]
  %s7 = inlined_call_operand.hbm [shape: f32[8,128], index: 7, kind: output, shape index: {}]
  %s8 = sld [smem:[#allocation0]]
  $region58: #{tpu_custom_call.1} parent=0
    _
  %s10 = ssub.s32 1, %s8
  %s11 = scalar_select 0, %s10, %s8
  $region1: #{tpu_custom_call.1} parent=0
    #allocation2 [shape = 'u8[2048]{0}', space=vmem, size = 0x800, scoped, tag = 'input window, operand 0, single buffered']
    #allocation3 [shape = 's32[1]{0}', space=sflag, size = 0x4, scoped, tag = 'scoped memory for tpu_custom_call.1']
    #allocation4 [shape = 's32[1]{0}', space=sflag, size = 0x4, scoped, tag = 'scoped memory for tpu_custom_call.1']
    #allocation5 [shape = 'u8[32768]{0}', space=vmem, size = 0x8000, scoped, tag = 'input window, operand 1, single buffered']
    #allocation6 [shape = 's32[1]{0}', space=sflag, size = 0x4, scoped, tag = 'scoped memory for tpu_custom_call.1']
    #allocation7 [shape = 'u8[4096]{0}', space=vmem, size = 0x1000, scoped, tag = 'input window, operand 2, single buffered']
    #allocation8 [shape = 'u8[32768]{0}', space=vmem, size = 0x8000, scoped, tag = 'input window, operand 3, single buffered']
    #allocation9 [shape = 's32[1]{0}', space=sflag, size = 0x4, scoped, tag = 'scoped memory for tpu_custom_call.1']
    #allocation10 [shape = 'u8[32768]{0}', space=vmem, size = 0x8000, scoped, tag = 'input window, operand 5, single buffered']
    #allocation11 [shape = 'u8[4096]{0}', space=vmem, size = 0x1000, scoped, tag = 'output window, operand 0, single buffered']
    %12 = vsyncpa [#allocation3], 0
    %13 = vsyncpa [#allocation6], 0
    %14 = vsyncpa [#allocation9], 0
    %15 = vsyncpa [#allocation4], 0
    // Predicated region
    $region2: #{tpu_custom_call.1} parent=1 // pred_check
      _
    $region3: #{tpu_custom_call.1} parent=1 // pred_check_branch
      %17 = sbr.rel (0) target = $region5
    $region4: #{tpu_custom_call.1} parent=1 // pred_region
      %s19 = ssub.s32 64, 64
      %20 = vsyncadd [#allocation3], %s19
      %s22 = sshll.u32 [#allocation2], 4
      %s23 = int_to_ptr.vmem [resolvable:$true] %s22
      %25 = dma.hbm_to_vmem [thread:$0]  %s0, 64, %s23, [#allocation3]
    $region5: #{tpu_custom_call.1} parent=1 // pred_fallthru
      _
    // Predicated region
    $region6: #{tpu_custom_call.1} parent=1 // pred_check
      _
    $region7: #{tpu_custom_call.1} parent=1 // pred_check_branch
      %27 = sbr.rel (0) target = $region9
    $region8: #{tpu_custom_call.1} parent=1 // pred_region
      %s29 = ssub.s32 1024, 1024
      %30 = vsyncadd [#allocation6], %s29
      %s31 = sshll.u32 [#allocation5], 4
      %s32 = int_to_ptr.vmem [resolvable:$true] %s31
      %37 = dma.hbm_to_vmem [thread:$0]  %s1, 1024, %s32, [#allocation6], 64, 64, 4
    $region9: #{tpu_custom_call.1} parent=1 // pred_fallthru
      _
    // Predicated region
    $region10: #{tpu_custom_call.1} parent=1 // pred_check
      _
    $region11: #{tpu_custom_call.1} parent=1 // pred_check_branch
      %39 = sbr.rel (0) target = $region13
    $region12: #{tpu_custom_call.1} parent=1 // pred_region
      %s41 = ssub.s32 128, 128
      %42 = vsyncadd [#allocation6], %s41
      %s44 = sshll.u32 [#allocation7], 4
      %s45 = int_to_ptr.vmem [resolvable:$true] %s44
      %47 = dma.hbm_to_vmem [thread:$0]  %s2, 128, %s45, [#allocation6]
    $region13: #{tpu_custom_call.1} parent=1 // pred_fallthru
      _
    // Predicated region
    $region14: #{tpu_custom_call.1} parent=1 // pred_check
      _
    $region15: #{tpu_custom_call.1} parent=1 // pred_check_branch
      %49 = sbr.rel (0) target = $region17
    $region16: #{tpu_custom_call.1} parent=1 // pred_region
      %s51 = ssub.s32 1024, 1024
      %52 = vsyncadd [#allocation9], %s51
      %s53 = sshll.u32 [#allocation8], 4
      %s54 = int_to_ptr.vmem [resolvable:$true] %s53
      %59 = dma.hbm_to_vmem [thread:$0]  %s3, 1024, %s54, [#allocation9], 64, 64, 4
    $region17: #{tpu_custom_call.1} parent=1 // pred_fallthru
      _
    // Predicated region
    $region18: #{tpu_custom_call.1} parent=1 // pred_check
      _
    $region19: #{tpu_custom_call.1} parent=1 // pred_check_branch
      %61 = sbr.rel (0) target = $region21
    $region20: #{tpu_custom_call.1} parent=1 // pred_region
      _
    $region21: #{tpu_custom_call.1} parent=1 // pred_fallthru
      _
    // Predicated region
    $region22: #{tpu_custom_call.1} parent=1 // pred_check
      _
    $region23: #{tpu_custom_call.1} parent=1 // pred_check_branch
      %63 = sbr.rel (0) target = $region25
    $region24: #{tpu_custom_call.1} parent=1 // pred_region
      %s65 = ssub.s32 1024, 1024
      %66 = vsyncadd [#allocation9], %s65
      %s67 = sshll.u32 [#allocation10], 4
      %s68 = int_to_ptr.vmem [resolvable:$true] %s67
      %73 = dma.hbm_to_vmem [thread:$0]  %s5, 1024, %s68, [#allocation9], 64, 64, 4
    $region25: #{tpu_custom_call.1} parent=1 // pred_fallthru
      _
    // Predicated region
    $region26: #{tpu_custom_call.1} parent=1 // pred_check
      _
    $region27: #{tpu_custom_call.1} parent=1 // pred_check_branch
      %75 = sbr.rel (0) target = $region29
    $region28: #{tpu_custom_call.1} parent=1 // pred_region
      _
    $region29: #{tpu_custom_call.1} parent=1 // pred_fallthru
      _
    // Predicated region
    $region30: #{tpu_custom_call.1} parent=1 // pred_check
      _
    $region31: #{tpu_custom_call.1} parent=1 // pred_check_branch
      %77 = sbr.rel (0) target = $region33
    $region32: #{tpu_custom_call.1} parent=1 // pred_region
      %78 = dma.done [#allocation3], 64
    $region33: #{tpu_custom_call.1} parent=1 // pred_fallthru
      _
    // Predicated region
    $region34: #{tpu_custom_call.1} parent=1 // pred_check
      _
    $region35: #{tpu_custom_call.1} parent=1 // pred_check_branch
      %80 = sbr.rel (0) target = $region37
    $region36: #{tpu_custom_call.1} parent=1 // pred_region
      %81 = dma.done [#allocation6], 1024
    $region37: #{tpu_custom_call.1} parent=1 // pred_fallthru
      _
    // Predicated region
    $region38: #{tpu_custom_call.1} parent=1 // pred_check
      _
    $region39: #{tpu_custom_call.1} parent=1 // pred_check_branch
      %83 = sbr.rel (0) target = $region41
    $region40: #{tpu_custom_call.1} parent=1 // pred_region
      %84 = dma.done [#allocation6], 128
    $region41: #{tpu_custom_call.1} parent=1 // pred_fallthru
      _
    // Predicated region
    $region42: #{tpu_custom_call.1} parent=1 // pred_check
      _
    $region43: #{tpu_custom_call.1} parent=1 // pred_check_branch
      %86 = sbr.rel (0) target = $region45
    $region44: #{tpu_custom_call.1} parent=1 // pred_region
      %87 = dma.done [#allocation9], 1024
    $region45: #{tpu_custom_call.1} parent=1 // pred_fallthru
      _
    // Predicated region
    $region46: #{tpu_custom_call.1} parent=1 // pred_check
      _
    $region47: #{tpu_custom_call.1} parent=1 // pred_check_branch
      %89 = sbr.rel (0) target = $region49
    $region48: #{tpu_custom_call.1} parent=1 // pred_region
      %90 = dma.done [#allocation9], 1024
    $region49: #{tpu_custom_call.1} parent=1 // pred_fallthru
      _
    %v92 = vld [vmem:[#allocation2] sm:$0xf]
    %v93 = vld [vmem:[#allocation5] sm:$0xf]
    %v94 = vld [vmem:[#allocation5 + $0x4] sm:$0xf]
    %v95 = vld [vmem:[#allocation5 + $0x8] sm:$0xf]
    %v96 = vld [vmem:[#allocation5 + $0xc] sm:$0xf]
    %v97 = vld [vmem:[#allocation5 + $0x10] sm:$0xf]
    %v98 = vld [vmem:[#allocation5 + $0x14] sm:$0xf]
    %v99 = vld [vmem:[#allocation5 + $0x18] sm:$0xf]
    %v100 = vld [vmem:[#allocation5 + $0x1c] sm:$0xf]
    %v101 = vld [vmem:[#allocation5 + $0x20] sm:$0xf]
    %v102 = vld [vmem:[#allocation5 + $0x24] sm:$0xf]
    %v103 = vld [vmem:[#allocation5 + $0x28] sm:$0xf]
    %v104 = vld [vmem:[#allocation5 + $0x2c] sm:$0xf]
    %v105 = vld [vmem:[#allocation5 + $0x30] sm:$0xf]
    %v106 = vld [vmem:[#allocation5 + $0x34] sm:$0xf]
    %v107 = vld [vmem:[#allocation5 + $0x38] sm:$0xf]
    %v108 = vld [vmem:[#allocation5 + $0x3c] sm:$0xf]
    %v109 = vld [vmem:[#allocation7] sm:$0xff]
    %v126 = vunpack.c.l.b16 %v93
    %v127 = vunpack.c.l.b16 %v94
    %v128 = vunpack.c.l.b16 %v95
    %v129 = vunpack.c.l.b16 %v96
    %v130 = vunpack.c.l.b16 %v97
    %v131 = vunpack.c.l.b16 %v98
    %v132 = vunpack.c.l.b16 %v99
    %v133 = vunpack.c.l.b16 %v100
    %v134 = vunpack.c.l.b16 %v101
    %v135 = vunpack.c.l.b16 %v102
    %v136 = vunpack.c.l.b16 %v103
    %v137 = vunpack.c.l.b16 %v104
    %v138 = vunpack.c.l.b16 %v105
    %v139 = vunpack.c.l.b16 %v106
    %v140 = vunpack.c.l.b16 %v107
    %v141 = vunpack.c.l.b16 %v108
    %v142 = vpack.c.b16 %v127, %v126
    %v143 = vpack.c.b16 %v129, %v128
    %v144 = vpack.c.b16 %v131, %v130
    %v145 = vpack.c.b16 %v133, %v132
    %v146 = vpack.c.b16 %v135, %v134
    %v147 = vpack.c.b16 %v137, %v136
    %v148 = vpack.c.b16 %v139, %v138
    %v149 = vpack.c.b16 %v141, %v140
    %158 = vmatprep.subr.bf16.mxu0 0
    %159 = vmatpush1.bf16.msra.mxu0 %v142
    %160 = vmatprep.subr.bf16.mxu0 0
    %161 = vmatpush1.bf16.msra.mxu0 %v143
    %162 = vmatprep.subr.bf16.mxu0 0
    %163 = vmatpush1.bf16.msra.mxu0 %v144
    %164 = vmatprep.subr.bf16.mxu0 0
    %165 = vmatpush1.bf16.msra.mxu0 %v145
    %166 = vmatprep.subr.bf16.mxu0 0
    %167 = vmatpush1.bf16.msra.mxu0 %v146
    %168 = vmatprep.subr.bf16.mxu0 0
    %169 = vmatpush1.bf16.msra.mxu0 %v147
    %170 = vmatprep.subr.bf16.mxu0 0
    %171 = vmatpush1.bf16.msra.mxu0 %v148
    %172 = vmatprep.subr.bf16.mxu0 0
    %173 = vmatpush1.bf16.msra.mxu0 %v149
    %174 = vmatprep.subr.bf16.mxu0 0
    %175 = vmatpush1.bf16.msra.mxu0 0
    %176 = vmatprep.subr.bf16.mxu0 0
    %177 = vmatpush1.bf16.msra.mxu0 0
    %178 = vmatprep.subr.bf16.mxu0 0
    %179 = vmatpush1.bf16.msra.mxu0 0
    %180 = vmatprep.subr.bf16.mxu0 0
    %181 = vmatpush1.bf16.msra.mxu0 0
    %182 = vmatprep.subr.bf16.mxu0 0
    %183 = vmatpush1.bf16.msra.mxu0 0
    %184 = vmatprep.subr.bf16.mxu0 0
    %185 = vmatpush1.bf16.msra.mxu0 0
    %186 = vmatprep.subr.bf16.mxu0 0
    %187 = vmatpush1.bf16.msra.mxu0 0
    %188 = vmatprep.subr.bf16.mxu0 0
    %189 = vmatpush1.bf16.msra.mxu0 0
    %190 = vmatprep.mubr.bf16.mxu0 0
    %191 = vmatmul.mubr.bf16.gmra.mrb[0].mxu0 %v92
    %v192 = vpop.f32.mrb[0].mxu0
    %v193 = vadd.f32 0.0, %v192
    %v194 = vpop.f32.mrb[0].mxu0
    %v195 = vpop.f32.mrb[0].mxu0
    %v196 = vpop.f32.mrb[0].mxu0
    %197 = vdwg.mxu0
    %v198 = vrot.slane %v193, 4
    %v199 = vadd.f32 %v193, %v198
    %v200 = vrot.slane %v199, 2
    %v201 = vadd.f32 %v199, %v200
    %v202 = vrot.slane %v201, 1
    %v203 = vadd.f32 %v201, %v202
    %v204 = vrcp.pop 8.0
    %v205 = vmul.f32 %v203, %v204
    %v206 = vsub.f32 %v193, %v205
    %v207 = vmul.f32 %v206, %v206
    %v208 = vrot.slane %v207, 4
    %v209 = vadd.f32 %v207, %v208
    %v210 = vrot.slane %v209, 2
    %v211 = vadd.f32 %v209, %v210
    %v212 = vrot.slane %v211, 1
    %v213 = vadd.f32 %v211, %v212
    %v214 = vmul.f32 %v213, %v204
    %v215 = vadd.f32 %v214, 1e-05
    %v216 = vrsqrt.pop %v215
    %v217 = vmul.f32 %v109, %v216
    %v218 = vlaneseq
    %v219 = vshrl.u32 %v218, 7
    %v220 = vsub.s32 1, %v219
    %v221 = vrot.slane %v217, %v220
    %v222 = vmul.f32 %v206, %v221
    %v223 = vlaneseq
    %v224 = vshrl.u32 %v223, 7
    %v225 = vsub.s32 2, %v224
    %v226 = vrot.slane %v109, %v225
    %v227 = vadd.f32 %v222, %v226
    %v228 = vmul.f32 %v227, 0.01
    %v229 = vmax.f32 %v227, %v228
    %v230 = vld [vmem:[#allocation8] sm:$0xf]
    %v231 = vld [vmem:[#allocation8 + $0x4] sm:$0xf]
    %v232 = vld [vmem:[#allocation8 + $0x8] sm:$0xf]
    %v233 = vld [vmem:[#allocation8 + $0xc] sm:$0xf]
    %v234 = vld [vmem:[#allocation8 + $0x10] sm:$0xf]
    %v235 = vld [vmem:[#allocation8 + $0x14] sm:$0xf]
    %v236 = vld [vmem:[#allocation8 + $0x18] sm:$0xf]
    %v237 = vld [vmem:[#allocation8 + $0x1c] sm:$0xf]
    %v238 = vld [vmem:[#allocation8 + $0x20] sm:$0xf]
    %v239 = vld [vmem:[#allocation8 + $0x24] sm:$0xf]
    %v240 = vld [vmem:[#allocation8 + $0x28] sm:$0xf]
    %v241 = vld [vmem:[#allocation8 + $0x2c] sm:$0xf]
    %v242 = vld [vmem:[#allocation8 + $0x30] sm:$0xf]
    %v243 = vld [vmem:[#allocation8 + $0x34] sm:$0xf]
    %v244 = vld [vmem:[#allocation8 + $0x38] sm:$0xf]
    %v245 = vld [vmem:[#allocation8 + $0x3c] sm:$0xf]
    %v246 = vld [vmem:[%s4] sm:$0xff]
    %v247 = vpack.c.bf16 %v229, %v229
    %v264 = vunpack.c.l.b16 %v230
    %v265 = vunpack.c.l.b16 %v231
    %v266 = vunpack.c.l.b16 %v232
    %v267 = vunpack.c.l.b16 %v233
    %v268 = vunpack.c.l.b16 %v234
    %v269 = vunpack.c.l.b16 %v235
    %v270 = vunpack.c.l.b16 %v236
    %v271 = vunpack.c.l.b16 %v237
    %v272 = vunpack.c.l.b16 %v238
    %v273 = vunpack.c.l.b16 %v239
    %v274 = vunpack.c.l.b16 %v240
    %v275 = vunpack.c.l.b16 %v241
    %v276 = vunpack.c.l.b16 %v242
    %v277 = vunpack.c.l.b16 %v243
    %v278 = vunpack.c.l.b16 %v244
    %v279 = vunpack.c.l.b16 %v245
    %v280 = vpack.c.b16 %v265, %v264
    %v281 = vpack.c.b16 %v267, %v266
    %v282 = vpack.c.b16 %v269, %v268
    %v283 = vpack.c.b16 %v271, %v270
    %v284 = vpack.c.b16 %v273, %v272
    %v285 = vpack.c.b16 %v275, %v274
    %v286 = vpack.c.b16 %v277, %v276
    %v287 = vpack.c.b16 %v279, %v278
    %296 = vmatprep.subr.bf16.mxu0 0
    %297 = vmatpush1.bf16.msra.mxu0 %v280
    %298 = vmatprep.subr.bf16.mxu0 0
    %299 = vmatpush1.bf16.msra.mxu0 %v281
    %300 = vmatprep.subr.bf16.mxu0 0
    %301 = vmatpush1.bf16.msra.mxu0 %v282
    %302 = vmatprep.subr.bf16.mxu0 0
    %303 = vmatpush1.bf16.msra.mxu0 %v283
    %304 = vmatprep.subr.bf16.mxu0 0
    %305 = vmatpush1.bf16.msra.mxu0 %v284
    %306 = vmatprep.subr.bf16.mxu0 0
    %307 = vmatpush1.bf16.msra.mxu0 %v285
    %308 = vmatprep.subr.bf16.mxu0 0
    %309 = vmatpush1.bf16.msra.mxu0 %v286
    %310 = vmatprep.subr.bf16.mxu0 0
    %311 = vmatpush1.bf16.msra.mxu0 %v287
    %312 = vmatprep.subr.bf16.mxu0 0
    %313 = vmatpush1.bf16.msra.mxu0 0
    %314 = vmatprep.subr.bf16.mxu0 0
    %315 = vmatpush1.bf16.msra.mxu0 0
    %316 = vmatprep.subr.bf16.mxu0 0
    %317 = vmatpush1.bf16.msra.mxu0 0
    %318 = vmatprep.subr.bf16.mxu0 0
    %319 = vmatpush1.bf16.msra.mxu0 0
    %320 = vmatprep.subr.bf16.mxu0 0
    %321 = vmatpush1.bf16.msra.mxu0 0
    %322 = vmatprep.subr.bf16.mxu0 0
    %323 = vmatpush1.bf16.msra.mxu0 0
    %324 = vmatprep.subr.bf16.mxu0 0
    %325 = vmatpush1.bf16.msra.mxu0 0
    %326 = vmatprep.subr.bf16.mxu0 0
    %327 = vmatpush1.bf16.msra.mxu0 0
    %328 = vmatprep.mubr.bf16.mxu0 0
    %329 = vmatmul.mubr.bf16.gmra.mrb[0].mxu0 %v247
    %v330 = vpop.f32.mrb[0].mxu0
    %v331 = vadd.f32 0.0, %v330
    %v332 = vpop.f32.mrb[0].mxu0
    %v333 = vpop.f32.mrb[0].mxu0
    %v334 = vpop.f32.mrb[0].mxu0
    %335 = vdwg.mxu0
    %v336 = vrot.slane %v331, 4
    %v337 = vadd.f32 %v331, %v336
    %v338 = vrot.slane %v337, 2
    %v339 = vadd.f32 %v337, %v338
    %v340 = vrot.slane %v339, 1
    %v341 = vadd.f32 %v339, %v340
    %v342 = vmul.f32 %v341, %v204
    %v343 = vsub.f32 %v331, %v342
    %v344 = vmul.f32 %v343, %v343
    %v345 = vrot.slane %v344, 4
    %v346 = vadd.f32 %v344, %v345
    %v347 = vrot.slane %v346, 2
    %v348 = vadd.f32 %v346, %v347
    %v349 = vrot.slane %v348, 1
    %v350 = vadd.f32 %v348, %v349
    %v351 = vmul.f32 %v350, %v204
    %v352 = vadd.f32 %v351, 1e-05
    %v353 = vrsqrt.pop %v352
    %v354 = vmul.f32 %v246, %v353
    %v355 = vlaneseq
    %v356 = vshrl.u32 %v355, 7
    %v357 = vsub.s32 1, %v356
    %v358 = vrot.slane %v354, %v357
    %v359 = vmul.f32 %v343, %v358
    %v360 = vlaneseq
    %v361 = vshrl.u32 %v360, 7
    %v362 = vsub.s32 2, %v361
    %v363 = vrot.slane %v246, %v362
    %v364 = vadd.f32 %v359, %v363
    %v365 = vmul.f32 %v364, 0.01
    %v366 = vmax.f32 %v364, %v365
    %v367 = vld [vmem:[#allocation10] sm:$0xf]
    %v368 = vld [vmem:[#allocation10 + $0x4] sm:$0xf]
    %v369 = vld [vmem:[#allocation10 + $0x8] sm:$0xf]
    %v370 = vld [vmem:[#allocation10 + $0xc] sm:$0xf]
    %v371 = vld [vmem:[#allocation10 + $0x10] sm:$0xf]
    %v372 = vld [vmem:[#allocation10 + $0x14] sm:$0xf]
    %v373 = vld [vmem:[#allocation10 + $0x18] sm:$0xf]
    %v374 = vld [vmem:[#allocation10 + $0x1c] sm:$0xf]
    %v375 = vld [vmem:[#allocation10 + $0x20] sm:$0xf]
    %v376 = vld [vmem:[#allocation10 + $0x24] sm:$0xf]
    %v377 = vld [vmem:[#allocation10 + $0x28] sm:$0xf]
    %v378 = vld [vmem:[#allocation10 + $0x2c] sm:$0xf]
    %v379 = vld [vmem:[#allocation10 + $0x30] sm:$0xf]
    %v380 = vld [vmem:[#allocation10 + $0x34] sm:$0xf]
    %v381 = vld [vmem:[#allocation10 + $0x38] sm:$0xf]
    %v382 = vld [vmem:[#allocation10 + $0x3c] sm:$0xf]
    %v383 = vld [vmem:[%s6] sm:$0xff]
    %v384 = vpack.c.bf16 %v366, %v366
    %v401 = vunpack.c.l.b16 %v367
    %v402 = vunpack.c.l.b16 %v368
    %v403 = vunpack.c.l.b16 %v369
    %v404 = vunpack.c.l.b16 %v370
    %v405 = vunpack.c.l.b16 %v371
    %v406 = vunpack.c.l.b16 %v372
    %v407 = vunpack.c.l.b16 %v373
    %v408 = vunpack.c.l.b16 %v374
    %v409 = vunpack.c.l.b16 %v375
    %v410 = vunpack.c.l.b16 %v376
    %v411 = vunpack.c.l.b16 %v377
    %v412 = vunpack.c.l.b16 %v378
    %v413 = vunpack.c.l.b16 %v379
    %v414 = vunpack.c.l.b16 %v380
    %v415 = vunpack.c.l.b16 %v381
    %v416 = vunpack.c.l.b16 %v382
    %v417 = vpack.c.b16 %v402, %v401
    %v418 = vpack.c.b16 %v404, %v403
    %v419 = vpack.c.b16 %v406, %v405
    %v420 = vpack.c.b16 %v408, %v407
    %v421 = vpack.c.b16 %v410, %v409
    %v422 = vpack.c.b16 %v412, %v411
    %v423 = vpack.c.b16 %v414, %v413
    %v424 = vpack.c.b16 %v416, %v415
    %433 = vmatprep.subr.bf16.mxu0 0
    %434 = vmatpush1.bf16.msra.mxu0 %v417
    %435 = vmatprep.subr.bf16.mxu0 0
    %436 = vmatpush1.bf16.msra.mxu0 %v418
    %437 = vmatprep.subr.bf16.mxu0 0
    %438 = vmatpush1.bf16.msra.mxu0 %v419
    %439 = vmatprep.subr.bf16.mxu0 0
    %440 = vmatpush1.bf16.msra.mxu0 %v420
    %441 = vmatprep.subr.bf16.mxu0 0
    %442 = vmatpush1.bf16.msra.mxu0 %v421
    %443 = vmatprep.subr.bf16.mxu0 0
    %444 = vmatpush1.bf16.msra.mxu0 %v422
    %445 = vmatprep.subr.bf16.mxu0 0
    %446 = vmatpush1.bf16.msra.mxu0 %v423
    %447 = vmatprep.subr.bf16.mxu0 0
    %448 = vmatpush1.bf16.msra.mxu0 %v424
    %449 = vmatprep.subr.bf16.mxu0 0
    %450 = vmatpush1.bf16.msra.mxu0 0
    %451 = vmatprep.subr.bf16.mxu0 0
    %452 = vmatpush1.bf16.msra.mxu0 0
    %453 = vmatprep.subr.bf16.mxu0 0
    %454 = vmatpush1.bf16.msra.mxu0 0
    %455 = vmatprep.subr.bf16.mxu0 0
    %456 = vmatpush1.bf16.msra.mxu0 0
    %457 = vmatprep.subr.bf16.mxu0 0
    %458 = vmatpush1.bf16.msra.mxu0 0
    %459 = vmatprep.subr.bf16.mxu0 0
    %460 = vmatpush1.bf16.msra.mxu0 0
    %461 = vmatprep.subr.bf16.mxu0 0
    %462 = vmatpush1.bf16.msra.mxu0 0
    %463 = vmatprep.subr.bf16.mxu0 0
    %464 = vmatpush1.bf16.msra.mxu0 0
    %465 = vmatprep.mubr.bf16.mxu0 0
    %466 = vmatmul.mubr.bf16.gmra.mrb[0].mxu0 %v384
    %v467 = vpop.f32.mrb[0].mxu0
    %v468 = vadd.f32 0.0, %v467
    %v469 = vpop.f32.mrb[0].mxu0
    %v470 = vpop.f32.mrb[0].mxu0
    %v471 = vpop.f32.mrb[0].mxu0
    %472 = vdwg.mxu0
    %v473 = vrot.slane %v468, 4
    %v474 = vadd.f32 %v468, %v473
    %v475 = vrot.slane %v474, 2
    %v476 = vadd.f32 %v474, %v475
    %v477 = vrot.slane %v476, 1
    %v478 = vadd.f32 %v476, %v477
    %v479 = vmul.f32 %v478, %v204
    %v480 = vsub.f32 %v468, %v479
    %v481 = vmul.f32 %v480, %v480
    %v482 = vrot.slane %v481, 4
    %v483 = vadd.f32 %v481, %v482
    %v484 = vrot.slane %v483, 2
    %v485 = vadd.f32 %v483, %v484
    %v486 = vrot.slane %v485, 1
    %v487 = vadd.f32 %v485, %v486
    %v488 = vmul.f32 %v487, %v204
    %v489 = vadd.f32 %v488, 1e-05
    %v490 = vrsqrt.pop %v489
    %v491 = vmul.f32 %v383, %v490
    %v492 = vlaneseq
    %v493 = vshrl.u32 %v492, 7
    %v494 = vsub.s32 1, %v493
    %v495 = vrot.slane %v491, %v494
    %v496 = vmul.f32 %v480, %v495
    %v497 = vlaneseq
    %v498 = vshrl.u32 %v497, 7
    %v499 = vsub.s32 2, %v498
    %v500 = vrot.slane %v383, %v499
    %v501 = vadd.f32 %v496, %v500
    %v502 = vmul.f32 %v501, 0.01
    %v503 = vmax.f32 %v501, %v502
    %504 = vst [vmem:[#allocation11] sm:$0xff] %v503
    // Predicated region
    $region50: #{tpu_custom_call.1} parent=1 // pred_check
      _
    $region51: #{tpu_custom_call.1} parent=1 // pred_check_branch
      %506 = sbr.rel (0) target = $region53
    $region52: #{tpu_custom_call.1} parent=1 // pred_region
      %s508 = ssub.s32 128, 128
      %509 = vsyncadd [#allocation4], %s508
      %s511 = sshll.u32 [#allocation11], 4
      %s512 = int_to_ptr.vmem [resolvable:$true] %s511
      %514 = dma.vmem_to_hbm [thread:$0]  %s512, 128, %s7, [#allocation4]
    $region53: #{tpu_custom_call.1} parent=1 // pred_fallthru
      _
    // Predicated region
    $region54: #{tpu_custom_call.1} parent=1 // pred_check
      _
    $region55: #{tpu_custom_call.1} parent=1 // pred_check_branch
      %516 = sbr.rel (0) target = $region57
    $region56: #{tpu_custom_call.1} parent=1 // pred_region
      %517 = dma.done [#allocation4], 128
    $region57: #{tpu_custom_call.1} parent=1 // pred_fallthru
      _
    %518 = vsyncpa [#allocation3], 1
    %519 = vsyncpa [#allocation6], 1
    %520 = vsyncpa [#allocation9], 1
    %521 = vsyncpa [#allocation4], 1

</llo_original>
